<compile_context>
chip_gen: v7x
topology: tpu7x:2x2x1
jax: 0.10.0
libtpu: 0.0.40
codegen_flags: <defaults>
</compile_context>

<pallas_src>
import jax
import jax.numpy as jnp
from jax.experimental import pallas as pl
from jax.experimental.pallas import tpu as pltpu

LANE = 128     # lane width: last-dim padding target for hidden/class dims
SUBLANE = 8    # sublane width: row padding target


def _round_up(v, m):
    return pl.cdiv(v, m) * m


def _pad2d(arr, rows, cols):
    return jnp.pad(arr, ((0, rows - arr.shape[0]), (0, cols - arr.shape[1])))


# ----------------------------------------------------------------------------
# Pallas kernel: the whole 3-layer GCN hot path (6 matmuls + bias + relu)
# runs VMEM-resident in a single grid-less pallas_call (shapes are small).
# ----------------------------------------------------------------------------
def gcn_kernel(a_ref, x_ref, w1_ref, w2_ref, w3_ref, b_ref, out_ref):
    # A_hat / X arrive pre-cast to bf16 from the wrapper; weights arrive
    # padded + pre-cast to bf16 from init. Accumulation is f32 on the MXU;
    # bias-add / ReLU stay f32.
    hp = w1_ref.shape[1]          # padded hidden width (static)
    cp = w3_ref.shape[1]          # padded class width (static)

    a = a_ref[...]                # [Np, Np] bf16
    x = x_ref[...]                # [Np, F ] bf16 (F not lane-padded)

    # --- layer 1: relu( (A_hat @ X) @ W1 + b1 )  (reassociated: F < HID) ---
    ax = jnp.dot(a, x, preferred_element_type=jnp.float32)               # [Np, F]
    h = jnp.dot(ax.astype(jnp.bfloat16), w1_ref[...],
                preferred_element_type=jnp.float32) + b_ref[0:1, :hp]    # [Np, Hp]
    h = jnp.maximum(h, 0.0)
    # TODO(synk): dropout2 (p=0.1) is identity in eval/inference mode.

    # --- layer 2: relu( A_hat @ (H @ W2) + b2 ) ---
    hw = jnp.dot(h.astype(jnp.bfloat16), w2_ref[...],
                 preferred_element_type=jnp.float32)                     # [Np, Hp]
    h = jnp.dot(a, hw.astype(jnp.bfloat16),
                preferred_element_type=jnp.float32) + b_ref[1:2, :hp]
    h = jnp.maximum(h, 0.0)
    # TODO(synk): dropout3 (p=0.1) is identity in eval/inference mode.

    # --- layer 3: A_hat @ (H @ W3) + b3  (logits, no activation) ---
    hw = jnp.dot(h.astype(jnp.bfloat16), w3_ref[...],
                 preferred_element_type=jnp.float32)                     # [Np, Cp]
    out_ref[...] = jnp.dot(a, hw.astype(jnp.bfloat16),
                           preferred_element_type=jnp.float32) + b_ref[2:3, :cp]


# ----------------------------------------------------------------------------
# One-time parameter preparation (hoisted out of the per-call path):
# pad hidden/class dims to lane multiples, cast weights to bf16, pack biases.
# ----------------------------------------------------------------------------
def prepare_params(params):
    w1, b1, w2, b2, w3, b3 = params
    f, hid = w1.shape
    c = w3.shape[1]
    hp = _round_up(hid, LANE)
    cp = _round_up(c, LANE)
    bcols = max(hp, cp)

    w1_p = _pad2d(w1, f, hp).astype(jnp.bfloat16)       # [F,  Hp] (F unpadded)
    w2_p = _pad2d(w2, hp, hp).astype(jnp.bfloat16)      # [Hp, Hp]
    w3_p = _pad2d(w3, hp, cp).astype(jnp.bfloat16)      # [Hp, Cp]
    b_all = jnp.concatenate(                            # [3, bcols] f32
        [_pad2d(b1, 1, bcols), _pad2d(b2, 1, bcols), _pad2d(b3, 1, bcols)],
        axis=0).astype(jnp.float32)
    return (w1_p, w2_p, w3_p, b_all, c)


def gcn_forward(a_hat, x, prepared):
    """Fused 3-layer GCN forward. `prepared` comes from prepare_params()."""
    w1_p, w2_p, w3_p, b_all, num_classes = prepared
    n, f = x.shape
    np_ = _round_up(n, SUBLANE)
    cp = w3_p.shape[1]

    # Per-call prep: pad rows to a sublane multiple and cast the two dynamic
    # operands to bf16 so the kernel DMAs half the bytes and does no input
    # casts. (Weight prep is already hoisted to prepare_params.)
    a_p = _pad2d(a_hat, np_, np_).astype(jnp.bfloat16)
    x_p = _pad2d(x, np_, f).astype(jnp.bfloat16)

    vmem = pl.BlockSpec(memory_space=pltpu.MemorySpace.VMEM)
    out_padded = pl.pallas_call(
        gcn_kernel,
        out_shape=jax.ShapeDtypeStruct((np_, cp), jnp.float32),
        in_specs=[vmem] * 6,
        out_specs=vmem,
    )(a_p, x_p, w1_p, w2_p, w3_p, b_all)

    # Slice the lane-dense padded logits back to [N, C] outside the kernel.
    return out_padded[:n, :num_classes]


# ----------------------------------------------------------------------------
# Glue (plain JAX): build the GCN-normalized adjacency from edge_index,
# matching PyG GCNConv's gcn_norm  D^-1/2 (A + I) D^-1/2  with unit weights.
# ----------------------------------------------------------------------------
def build_normalized_adjacency(edge_index, num_nodes):
    src, dst = edge_index[0], edge_index[1]
    a = jnp.zeros((num_nodes, num_nodes), dtype=jnp.float32)
    a = a.at[src, dst].set(1.0)
    # Self loops: set the diagonal to 1 (instead of adding eye) so graphs that
    # already contain self loops keep weight 1.0, matching gcn_norm.
    diag = jnp.arange(num_nodes)
    a = a.at[diag, diag].set(1.0)
    deg = a.sum(axis=1)
    dinv = jnp.where(deg > 0, 1.0 / jnp.sqrt(deg), 0.0)
    return a * dinv[:, None] * dinv[None, :]


def glorot(key, shape):
    fan_in, fan_out = shape
    limit = jnp.sqrt(6.0 / (fan_in + fan_out))
    return jax.random.uniform(key, shape, jnp.float32, -limit, limit)


def init_params(key, num_features, hid, num_classes):
    k1, k2, k3 = jax.random.split(key, 3)
    w1 = glorot(k1, (num_features, hid))
    b1 = jnp.zeros((1, hid), jnp.float32)
    w2 = glorot(k2, (hid, hid))
    b2 = jnp.zeros((1, hid), jnp.float32)
    w3 = glorot(k3, (hid, num_classes))
    b3 = jnp.zeros((1, num_classes), jnp.float32)
    return (w1, b1, w2, b2, w3, b3)


if __name__ == "__main__":
    # Small synthetic graph consistent with the module's forward:
    #   N nodes, F input features, hid=64 hidden, C classes.
    N, F, HID, C = 32, 16, 64, 4

    key = jax.random.PRNGKey(0)
    kx, kp = jax.random.split(key)

    # Node features.
    x = jax.random.normal(kx, (N, F), dtype=jnp.float32)

    # Deterministic ring graph, undirected (both directions), shape [2, E].
    idx = jnp.arange(N)
    src = jnp.concatenate([idx, (idx + 1) % N])
    dst = jnp.concatenate([(idx + 1) % N, idx])
    edge_index = jnp.stack([src, dst], axis=0)

    a_hat = build_normalized_adjacency(edge_index, N)
    params = init_params(kp, F, HID, C)
    prepared = prepare_params(params)   # one-time: pad + bf16-cast + pack

    fwd = jax.jit(lambda a, feats: gcn_forward(a, feats, prepared))
    out = jax.block_until_ready(fwd(a_hat, x))

    assert out.shape == (N, C) and out.dtype == jnp.float32
    assert bool(jnp.all(jnp.isfinite(out)))

    print("KERNEL_OK")
</pallas_src>

<mosaic_0001>
module attributes {stable_mosaic.version = 11 : i64} {
  func.func @gcn_kernel(%arg0: memref<32x32xbf16, #tpu.memory_space<vmem>>, %arg1: memref<32x16xbf16, #tpu.memory_space<vmem>>, %arg2: memref<16x128xbf16, #tpu.memory_space<vmem>>, %arg3: memref<128x128xbf16, #tpu.memory_space<vmem>>, %arg4: memref<128x128xbf16, #tpu.memory_space<vmem>>, %arg5: memref<3x128xf32, #tpu.memory_space<vmem>>, %arg6: memref<32x128xf32, #tpu.memory_space<vmem>>) attributes {dimension_semantics = [], scalar_prefetch = 0 : i64, scratch_operands = 0 : i64, tpu.core_type = #tpu.core_type<tc>} {
    %c0 = arith.constant 0 : index
    %c0_0 = arith.constant 0 : index
    %0 = vector.load %arg0[%c0, %c0_0] : memref<32x32xbf16, #tpu.memory_space<vmem>>, vector<32x32xbf16>
    %c0_1 = arith.constant 0 : index
    %c0_2 = arith.constant 0 : index
    %1 = vector.load %arg1[%c0_1, %c0_2] : memref<32x16xbf16, #tpu.memory_space<vmem>>, vector<32x16xbf16>
    %cst = arith.constant dense<0.000000e+00> : vector<32x16xf32>
    %2 = tpu.matmul %0, %1, %cst {dimension_numbers = #tpu.dot_dimension_numbers<[1], [0], [0], [1], [0, 0, 1, 1], [], []>} : vector<32x32xbf16>, vector<32x16xbf16>, vector<32x16xf32> -> vector<32x16xf32>
    %3 = arith.truncf %2 : vector<32x16xf32> to vector<32x16xbf16>
    %c0_3 = arith.constant 0 : index
    %c0_4 = arith.constant 0 : index
    %4 = vector.load %arg2[%c0_3, %c0_4] : memref<16x128xbf16, #tpu.memory_space<vmem>>, vector<16x128xbf16>
    %cst_5 = arith.constant dense<0.000000e+00> : vector<32x128xf32>
    %5 = tpu.matmul %3, %4, %cst_5 {dimension_numbers = #tpu.dot_dimension_numbers<[1], [0], [0], [1], [0, 0, 1, 1], [], []>} : vector<32x16xbf16>, vector<16x128xbf16>, vector<32x128xf32> -> vector<32x128xf32>
    %c0_6 = arith.constant 0 : index
    %c0_7 = arith.constant 0 : index
    %6 = vector.load %arg5[%c0_6, %c0_7] : memref<3x128xf32, #tpu.memory_space<vmem>>, vector<1x128xf32>
    %7 = vector.broadcast %6 : vector<1x128xf32> to vector<32x128xf32>
    %8 = arith.addf %5, %7 : vector<32x128xf32>
    %cst_8 = arith.constant 0.000000e+00 : f32
    %9 = vector.broadcast %cst_8 : f32 to vector<32x128xf32>
    %10 = arith.maximumf %8, %9 : vector<32x128xf32>
    %11 = arith.truncf %10 : vector<32x128xf32> to vector<32x128xbf16>
    %c0_9 = arith.constant 0 : index
    %c0_10 = arith.constant 0 : index
    %12 = vector.load %arg3[%c0_9, %c0_10] : memref<128x128xbf16, #tpu.memory_space<vmem>>, vector<128x128xbf16>
    %cst_11 = arith.constant dense<0.000000e+00> : vector<32x128xf32>
    %13 = tpu.matmul %11, %12, %cst_11 {dimension_numbers = #tpu.dot_dimension_numbers<[1], [0], [0], [1], [0, 0, 1, 1], [], []>} : vector<32x128xbf16>, vector<128x128xbf16>, vector<32x128xf32> -> vector<32x128xf32>
    %14 = arith.truncf %13 : vector<32x128xf32> to vector<32x128xbf16>
    %cst_12 = arith.constant dense<0.000000e+00> : vector<32x128xf32>
    %15 = tpu.matmul %0, %14, %cst_12 {dimension_numbers = #tpu.dot_dimension_numbers<[1], [0], [0], [1], [0, 0, 1, 1], [], []>} : vector<32x32xbf16>, vector<32x128xbf16>, vector<32x128xf32> -> vector<32x128xf32>
    %c1 = arith.constant 1 : index
    %c0_13 = arith.constant 0 : index
    %16 = vector.load %arg5[%c1, %c0_13] : memref<3x128xf32, #tpu.memory_space<vmem>>, vector<1x128xf32>
    %17 = vector.broadcast %16 : vector<1x128xf32> to vector<32x128xf32>
    %18 = arith.addf %15, %17 : vector<32x128xf32>
    %cst_14 = arith.constant 0.000000e+00 : f32
    %19 = vector.broadcast %cst_14 : f32 to vector<32x128xf32>
    %20 = arith.maximumf %18, %19 : vector<32x128xf32>
    %21 = arith.truncf %20 : vector<32x128xf32> to vector<32x128xbf16>
    %c0_15 = arith.constant 0 : index
    %c0_16 = arith.constant 0 : index
    %22 = vector.load %arg4[%c0_15, %c0_16] : memref<128x128xbf16, #tpu.memory_space<vmem>>, vector<128x128xbf16>
    %cst_17 = arith.constant dense<0.000000e+00> : vector<32x128xf32>
    %23 = tpu.matmul %21, %22, %cst_17 {dimension_numbers = #tpu.dot_dimension_numbers<[1], [0], [0], [1], [0, 0, 1, 1], [], []>} : vector<32x128xbf16>, vector<128x128xbf16>, vector<32x128xf32> -> vector<32x128xf32>
    %24 = arith.truncf %23 : vector<32x128xf32> to vector<32x128xbf16>
    %cst_18 = arith.constant dense<0.000000e+00> : vector<32x128xf32>
    %25 = tpu.matmul %0, %24, %cst_18 {dimension_numbers = #tpu.dot_dimension_numbers<[1], [0], [0], [1], [0, 0, 1, 1], [], []>} : vector<32x32xbf16>, vector<32x128xbf16>, vector<32x128xf32> -> vector<32x128xf32>
    %c2 = arith.constant 2 : index
    %c0_19 = arith.constant 0 : index
    %26 = vector.load %arg5[%c2, %c0_19] : memref<3x128xf32, #tpu.memory_space<vmem>>, vector<1x128xf32>
    %27 = vector.broadcast %26 : vector<1x128xf32> to vector<32x128xf32>
    %28 = arith.addf %25, %27 : vector<32x128xf32>
    %c0_20 = arith.constant 0 : index
    %c0_21 = arith.constant 0 : index
    %29 = vector.load %arg6[%c0_20, %c0_21] : memref<32x128xf32, #tpu.memory_space<vmem>>, vector<32x128xf32>
    tpu.vector_store %arg6[%c0_20, %c0_21], %28 {strides = array<i32>} : memref<32x128xf32, #tpu.memory_space<vmem>>, vector<32x128xf32>,
    return
  }
}

</mosaic_0001>

<llo_original>
// kernel: _lambda_.1
$region0: #{_lambda_.1}
  #allocation0 [shape = 'u32[]', space=smem, size = 0x4, offset = 0x4, fixed_abs, tag = 'smem constant byte address 0x4 - core index']
  #allocation1 [shape = 'u32[144,128]{1,0:T(1,128)}', space=vmem, size = 0x12000, scoped, tag = 'internal scratch']
  %s0 = inlined_call_operand.vmem [shape: bf16[32,32], index: 0, kind: input, shape index: {}]
  %s1 = inlined_call_operand.vmem [shape: bf16[32,16], index: 1, kind: input, shape index: {}]
  %s2 = inlined_call_operand.vmem [shape: bf16[16,128], index: 2, kind: input, shape index: {}]
  %s3 = inlined_call_operand.hbm [shape: bf16[128,128], index: 3, kind: input, shape index: {}]
  %s4 = inlined_call_operand.vmem [shape: bf16[128,128], index: 4, kind: input, shape index: {}]
  %s5 = inlined_call_operand.vmem [shape: f32[3,128], index: 5, kind: input, shape index: {}]
  %s6 = inlined_call_operand.vmem [shape: f32[32,128], index: 6, kind: output, shape index: {}]
  %s7 = sld [smem:[#allocation0]]
  $region38: #{_lambda_.1} parent=0
    _
  %s9 = ssub.s32 1, %s7
  %s10 = scalar_select 0, %s9, %s7
  $region1: #{_lambda_.1} parent=0
    #allocation2 [shape = 'u8[32768]{0}', space=vmem, size = 0x8000, scoped, tag = 'input window, operand 3, single buffered']
    #allocation3 [shape = 's32[1]{0}', space=sflag, size = 0x4, scoped, tag = 'scoped memory for _lambda_.1']
    %11 = vsyncpa [#allocation3], 0
    // Predicated region
    $region2: #{_lambda_.1} parent=1 // pred_check
      _
    $region3: #{_lambda_.1} parent=1 // pred_check_branch
      %13 = sbr.rel (0) target = $region5
    $region4: #{_lambda_.1} parent=1 // pred_region
      _
    $region5: #{_lambda_.1} parent=1 // pred_fallthru
      _
    // Predicated region
    $region6: #{_lambda_.1} parent=1 // pred_check
      _
    $region7: #{_lambda_.1} parent=1 // pred_check_branch
      %15 = sbr.rel (0) target = $region9
    $region8: #{_lambda_.1} parent=1 // pred_region
      _
    $region9: #{_lambda_.1} parent=1 // pred_fallthru
      _
    // Predicated region
    $region10: #{_lambda_.1} parent=1 // pred_check
      _
    $region11: #{_lambda_.1} parent=1 // pred_check_branch
      %17 = sbr.rel (0) target = $region13
    $region12: #{_lambda_.1} parent=1 // pred_region
      _
    $region13: #{_lambda_.1} parent=1 // pred_fallthru
      _
    // Predicated region
    $region14: #{_lambda_.1} parent=1 // pred_check
      _
    $region15: #{_lambda_.1} parent=1 // pred_check_branch
      %19 = sbr.rel (0) target = $region17
    $region16: #{_lambda_.1} parent=1 // pred_region
      %s21 = ssub.s32 1024, 1024
      %22 = vsyncadd [#allocation3], %s21
      %s23 = sshll.u32 [#allocation2], 4
      %s24 = int_to_ptr.vmem [resolvable:$true] %s23
      %29 = dma.hbm_to_vmem [thread:$0]  %s3, 1024, %s24, [#allocation3], 64, 64, 4
    $region17: #{_lambda_.1} parent=1 // pred_fallthru
      _
    // Predicated region
    $region18: #{_lambda_.1} parent=1 // pred_check
      _
    $region19: #{_lambda_.1} parent=1 // pred_check_branch
      %31 = sbr.rel (0) target = $region21
    $region20: #{_lambda_.1} parent=1 // pred_region
      _
    $region21: #{_lambda_.1} parent=1 // pred_fallthru
      _
    // Predicated region
    $region22: #{_lambda_.1} parent=1 // pred_check
      _
    $region23: #{_lambda_.1} parent=1 // pred_check_branch
      %33 = sbr.rel (0) target = $region25
    $region24: #{_lambda_.1} parent=1 // pred_region
      _
    $region25: #{_lambda_.1} parent=1 // pred_fallthru
      _
    // Predicated region
    $region26: #{_lambda_.1} parent=1 // pred_check
      _
    $region27: #{_lambda_.1} parent=1 // pred_check_branch
      %35 = sbr.rel (0) target = $region29
    $region28: #{_lambda_.1} parent=1 // pred_region
      %36 = dma.done [#allocation3], 1024
    $region29: #{_lambda_.1} parent=1 // pred_fallthru
      _
    %v38 = vld [vmem:[%s0] sm:$0xf]
    %v39 = vld [vmem:[%s0 + $0x4] sm:$0xf]
    %v40 = vld [vmem:[%s0 + $0x8] sm:$0xf]
    %v41 = vld [vmem:[%s0 + $0xc] sm:$0xf]
    %v42 = vld [vmem:[%s1] sm:$0xf]
    %v43 = vld [vmem:[%s1 + $0x4] sm:$0xf]
    %v44 = vld [vmem:[%s1 + $0x8] sm:$0xf]
    %v45 = vld [vmem:[%s1 + $0xc] sm:$0xf]
    %v50 = vunpack.c.l.b16 %v38
    %v51 = vunpack.c.l.b16 %v39
    %v52 = vunpack.c.l.b16 %v40
    %v53 = vunpack.c.l.b16 %v41
    %v54 = vpack.c.b16 %v51, %v50
    %v55 = vpack.c.b16 %v53, %v52
    %v60 = vunpack.c.l.b16 %v42
    %v61 = vunpack.c.l.b16 %v43
    %v62 = vunpack.c.l.b16 %v44
    %v63 = vunpack.c.l.b16 %v45
    %v64 = vpack.c.b16 %v61, %v60
    %v65 = vpack.c.b16 %v63, %v62
    %vm68 = vcmask 261120
    %v70 = vsel %vm68, %v54, 0
    %v73 = vsel %vm68, %v55, 0
    %75 = vmatprep.subr.bf16.mxu0 0
    %76 = vmatpush1.bf16.msra.mxu0 %v64
    %77 = vmatprep.subr.bf16.mxu0 0
    %78 = vmatpush1.bf16.msra.mxu0 %v65
    %79 = vmatprep.subr.bf16.mxu0 0
    %80 = vmatpush1.bf16.msra.mxu0 0
    %81 = vmatprep.subr.bf16.mxu0 0
    %82 = vmatpush1.bf16.msra.mxu0 0
    %83 = vmatprep.subr.bf16.mxu0 0
    %84 = vmatpush1.bf16.msra.mxu0 0
    %85 = vmatprep.subr.bf16.mxu0 0
    %86 = vmatpush1.bf16.msra.mxu0 0
    %87 = vmatprep.subr.bf16.mxu0 0
    %88 = vmatpush1.bf16.msra.mxu0 0
    %89 = vmatprep.subr.bf16.mxu0 0
    %90 = vmatpush1.bf16.msra.mxu0 0
    %91 = vmatprep.subr.bf16.mxu0 0
    %92 = vmatpush1.bf16.msra.mxu0 0
    %93 = vmatprep.subr.bf16.mxu0 0
    %94 = vmatpush1.bf16.msra.mxu0 0
    %95 = vmatprep.subr.bf16.mxu0 0
    %96 = vmatpush1.bf16.msra.mxu0 0
    %97 = vmatprep.subr.bf16.mxu0 0
    %98 = vmatpush1.bf16.msra.mxu0 0
    %99 = vmatprep.subr.bf16.mxu0 0
    %100 = vmatpush1.bf16.msra.mxu0 0
    %101 = vmatprep.subr.bf16.mxu0 0
    %102 = vmatpush1.bf16.msra.mxu0 0
    %103 = vmatprep.subr.bf16.mxu0 0
    %104 = vmatpush1.bf16.msra.mxu0 0
    %105 = vmatprep.subr.bf16.mxu0 0
    %106 = vmatpush1.bf16.msra.mxu0 0
    %107 = vmatprep.mubr.bf16.mxu0 0
    %108 = vmatmul.mubr.bf16.gmra.mrb[0].mxu0 %v70
    %v109 = vpop.f32.mrb[0].mxu0
    %v110 = vadd.f32 0.0, %v109
    %v111 = vpop.f32.mrb[0].mxu0
    %v112 = vpop.f32.mrb[0].mxu0
    %v113 = vadd.f32 0.0, %v112
    %v114 = vpop.f32.mrb[0].mxu0
    %115 = vmatprep.mubr.bf16.mxu0 0
    %116 = vmatmul.mubr.bf16.gmra.mrb[0].mxu0 %v73
    %v117 = vpop.f32.mrb[0].mxu0
    %v118 = vadd.f32 0.0, %v117
    %v119 = vpop.f32.mrb[0].mxu0
    %v120 = vpop.f32.mrb[0].mxu0
    %v121 = vadd.f32 0.0, %v120
    %v122 = vpop.f32.mrb[0].mxu0
    %123 = vdwg.mxu0
    %v124 = vpack.c.bf16 %v113, %v110
    %v125 = vpack.c.bf16 %v121, %v118
    %v126 = vld [vmem:[%s2] sm:$0xf]
    %v127 = vld [vmem:[%s2 + $0x4] sm:$0xf]
    %v128 = vld [vmem:[%s5] sm:$0x1]
    %v129 = vlaneseq
    %v130 = vshrl.u32 %v129, 7
    %v131 = vsub.s32 0, %v130
    %v132 = vrot.slane %v128, %v131
    %v135 = vunpack.c.l.b16 %v126
    %v136 = vunpack.c.l.b16 %v127
    %v137 = vpack.c.b16 %v136, %v135
    %vm139 = vcmask 130048
    %v141 = vsel %vm139, %v124, 0
    %v144 = vsel %vm139, %v125, 0
    %146 = vmatprep.subr.bf16.mxu0 0
    %147 = vmatpush1.bf16.msra.mxu0 %v137
    %148 = vmatprep.subr.bf16.mxu0 0
    %149 = vmatpush1.bf16.msra.mxu0 0
    %150 = vmatprep.subr.bf16.mxu0 0
    %151 = vmatpush1.bf16.msra.mxu0 0
    %152 = vmatprep.subr.bf16.mxu0 0
    %153 = vmatpush1.bf16.msra.mxu0 0
    %154 = vmatprep.subr.bf16.mxu0 0
    %155 = vmatpush1.bf16.msra.mxu0 0
    %156 = vmatprep.subr.bf16.mxu0 0
    %157 = vmatpush1.bf16.msra.mxu0 0
    %158 = vmatprep.subr.bf16.mxu0 0
    %159 = vmatpush1.bf16.msra.mxu0 0
    %160 = vmatprep.subr.bf16.mxu0 0
    %161 = vmatpush1.bf16.msra.mxu0 0
    %162 = vmatprep.subr.bf16.mxu0 0
    %163 = vmatpush1.bf16.msra.mxu0 0
    %164 = vmatprep.subr.bf16.mxu0 0
    %165 = vmatpush1.bf16.msra.mxu0 0
    %166 = vmatprep.subr.bf16.mxu0 0
    %167 = vmatpush1.bf16.msra.mxu0 0
    %168 = vmatprep.subr.bf16.mxu0 0
    %169 = vmatpush1.bf16.msra.mxu0 0
    %170 = vmatprep.subr.bf16.mxu0 0
    %171 = vmatpush1.bf16.msra.mxu0 0
    %172 = vmatprep.subr.bf16.mxu0 0
    %173 = vmatpush1.bf16.msra.mxu0 0
    %174 = vmatprep.subr.bf16.mxu0 0
    %175 = vmatpush1.bf16.msra.mxu0 0
    %176 = vmatprep.subr.bf16.mxu0 0
    %177 = vmatpush1.bf16.msra.mxu0 0
    %178 = vmatprep.mubr.bf16.mxu0 0
    %179 = vmatmul.mubr.bf16.gmra.mrb[0].mxu0 %v141
    %v180 = vpop.f32.mrb[0].mxu0
    %v181 = vadd.f32 %v132, %v180
    %v182 = vpop.f32.mrb[0].mxu0
    %v183 = vpop.f32.mrb[0].mxu0
    %v184 = vadd.f32 %v132, %v183
    %v185 = vpop.f32.mrb[0].mxu0
    %186 = vmatprep.mubr.bf16.mxu0 0
    %187 = vmatmul.mubr.bf16.gmra.mrb[0].mxu0 %v144
    %v188 = vpop.f32.mrb[0].mxu0
    %v189 = vadd.f32 %v132, %v188
    %v190 = vpop.f32.mrb[0].mxu0
    %v191 = vpop.f32.mrb[0].mxu0
    %v192 = vadd.f32 %v132, %v191
    %v193 = vpop.f32.mrb[0].mxu0
    %194 = vdwg.mxu0
    %v195 = vmax.f32 %v181, 0.0
    %v196 = vmax.f32 %v184, 0.0
    %v197 = vmax.f32 %v189, 0.0
    %v198 = vmax.f32 %v192, 0.0
    %v199 = vpack.c.bf16 %v196, %v195
    %v200 = vpack.c.bf16 %v198, %v197
    %v201 = vld [vmem:[#allocation2] sm:$0xf]
    %v202 = vld [vmem:[#allocation2 + $0x4] sm:$0xf]
    %v203 = vld [vmem:[#allocation2 + $0x8] sm:$0xf]
    %v204 = vld [vmem:[#allocation2 + $0xc] sm:$0xf]
    %v205 = vld [vmem:[#allocation2 + $0x10] sm:$0xf]
    %v206 = vld [vmem:[#allocation2 + $0x14] sm:$0xf]
    %v207 = vld [vmem:[#allocation2 + $0x18] sm:$0xf]
    %v208 = vld [vmem:[#allocation2 + $0x1c] sm:$0xf]
    %v209 = vld [vmem:[#allocation2 + $0x20] sm:$0xf]
    %v210 = vld [vmem:[#allocation2 + $0x24] sm:$0xf]
    %v211 = vld [vmem:[#allocation2 + $0x28] sm:$0xf]
    %v212 = vld [vmem:[#allocation2 + $0x2c] sm:$0xf]
    %v213 = vld [vmem:[#allocation2 + $0x30] sm:$0xf]
    %v214 = vld [vmem:[#allocation2 + $0x34] sm:$0xf]
    %v215 = vld [vmem:[#allocation2 + $0x38] sm:$0xf]
    %v216 = vld [vmem:[#allocation2 + $0x3c] sm:$0xf]
    %v233 = vunpack.c.l.b16 %v201
    %v234 = vunpack.c.l.b16 %v202
    %v235 = vunpack.c.l.b16 %v203
    %v236 = vunpack.c.l.b16 %v204
    %v237 = vunpack.c.l.b16 %v205
    %v238 = vunpack.c.l.b16 %v206
    %v239 = vunpack.c.l.b16 %v207
    %v240 = vunpack.c.l.b16 %v208
    %v241 = vunpack.c.l.b16 %v209
    %v242 = vunpack.c.l.b16 %v210
    %v243 = vunpack.c.l.b16 %v211
    %v244 = vunpack.c.l.b16 %v212
    %v245 = vunpack.c.l.b16 %v213
    %v246 = vunpack.c.l.b16 %v214
    %v247 = vunpack.c.l.b16 %v215
    %v248 = vunpack.c.l.b16 %v216
    %v249 = vpack.c.b16 %v234, %v233
    %v250 = vpack.c.b16 %v236, %v235
    %v251 = vpack.c.b16 %v238, %v237
    %v252 = vpack.c.b16 %v240, %v239
    %v253 = vpack.c.b16 %v242, %v241
    %v254 = vpack.c.b16 %v244, %v243
    %v255 = vpack.c.b16 %v246, %v245
    %v256 = vpack.c.b16 %v248, %v247
    %265 = vmatprep.subr.bf16.mxu0 0
    %266 = vmatpush1.bf16.msra.mxu0 %v249
    %267 = vmatprep.subr.bf16.mxu0 0
    %268 = vmatpush1.bf16.msra.mxu0 %v250
    %269 = vmatprep.subr.bf16.mxu0 0
    %270 = vmatpush1.bf16.msra.mxu0 %v251
    %271 = vmatprep.subr.bf16.mxu0 0
    %272 = vmatpush1.bf16.msra.mxu0 %v252
    %273 = vmatprep.subr.bf16.mxu0 0
    %274 = vmatpush1.bf16.msra.mxu0 %v253
    %275 = vmatprep.subr.bf16.mxu0 0
    %276 = vmatpush1.bf16.msra.mxu0 %v254
    %277 = vmatprep.subr.bf16.mxu0 0
    %278 = vmatpush1.bf16.msra.mxu0 %v255
    %279 = vmatprep.subr.bf16.mxu0 0
    %280 = vmatpush1.bf16.msra.mxu0 %v256
    %281 = vmatprep.subr.bf16.mxu0 0
    %282 = vmatpush1.bf16.msra.mxu0 0
    %283 = vmatprep.subr.bf16.mxu0 0
    %284 = vmatpush1.bf16.msra.mxu0 0
    %285 = vmatprep.subr.bf16.mxu0 0
    %286 = vmatpush1.bf16.msra.mxu0 0
    %287 = vmatprep.subr.bf16.mxu0 0
    %288 = vmatpush1.bf16.msra.mxu0 0
    %289 = vmatprep.subr.bf16.mxu0 0
    %290 = vmatpush1.bf16.msra.mxu0 0
    %291 = vmatprep.subr.bf16.mxu0 0
    %292 = vmatpush1.bf16.msra.mxu0 0
    %293 = vmatprep.subr.bf16.mxu0 0
    %294 = vmatpush1.bf16.msra.mxu0 0
    %295 = vmatprep.subr.bf16.mxu0 0
    %296 = vmatpush1.bf16.msra.mxu0 0
    %297 = vmatprep.mubr.bf16.mxu0 0
    %298 = vmatmul.mubr.bf16.gmra.mrb[0].mxu0 %v199
    %v299 = vpop.f32.mrb[0].mxu0
    %v300 = vadd.f32 0.0, %v299
    %v301 = vpop.f32.mrb[0].mxu0
    %v302 = vpop.f32.mrb[0].mxu0
    %v303 = vadd.f32 0.0, %v302
    %v304 = vpop.f32.mrb[0].mxu0
    %305 = vmatprep.mubr.bf16.mxu0 0
    %306 = vmatmul.mubr.bf16.gmra.mrb[0].mxu0 %v200
    %v307 = vpop.f32.mrb[0].mxu0
    %v308 = vadd.f32 0.0, %v307
    %v309 = vpop.f32.mrb[0].mxu0
    %v310 = vpop.f32.mrb[0].mxu0
    %v311 = vadd.f32 0.0, %v310
    %v312 = vpop.f32.mrb[0].mxu0
    %313 = vdwg.mxu0
    %v314 = vpack.c.bf16 %v303, %v300
    %v315 = vpack.c.bf16 %v311, %v308
    %v316 = vld [vmem:[%s5 + $0x1] sm:$0x1]
    %v317 = vlaneseq
    %v318 = vshrl.u32 %v317, 7
    %v319 = vsub.s32 0, %v318
    %v320 = vrot.slane %v316, %v319
    %321 = vmatprep.subr.bf16.mxu0 0
    %322 = vmatpush1.bf16.msra.mxu0 %v314
    %323 = vmatprep.subr.bf16.mxu0 0
    %324 = vmatpush1.bf16.msra.mxu0 %v315
    %325 = vmatprep.subr.bf16.mxu0 0
    %326 = vmatpush1.bf16.msra.mxu0 0
    %327 = vmatprep.subr.bf16.mxu0 0
    %328 = vmatpush1.bf16.msra.mxu0 0
    %329 = vmatprep.subr.bf16.mxu0 0
    %330 = vmatpush1.bf16.msra.mxu0 0
    %331 = vmatprep.subr.bf16.mxu0 0
    %332 = vmatpush1.bf16.msra.mxu0 0
    %333 = vmatprep.subr.bf16.mxu0 0
    %334 = vmatpush1.bf16.msra.mxu0 0
    %335 = vmatprep.subr.bf16.mxu0 0
    %336 = vmatpush1.bf16.msra.mxu0 0
    %337 = vmatprep.subr.bf16.mxu0 0
    %338 = vmatpush1.bf16.msra.mxu0 0
    %339 = vmatprep.subr.bf16.mxu0 0
    %340 = vmatpush1.bf16.msra.mxu0 0
    %341 = vmatprep.subr.bf16.mxu0 0
    %342 = vmatpush1.bf16.msra.mxu0 0
    %343 = vmatprep.subr.bf16.mxu0 0
    %344 = vmatpush1.bf16.msra.mxu0 0
    %345 = vmatprep.subr.bf16.mxu0 0
    %346 = vmatpush1.bf16.msra.mxu0 0
    %347 = vmatprep.subr.bf16.mxu0 0
    %348 = vmatpush1.bf16.msra.mxu0 0
    %349 = vmatprep.subr.bf16.mxu0 0
    %350 = vmatpush1.bf16.msra.mxu0 0
    %351 = vmatprep.subr.bf16.mxu0 0
    %352 = vmatpush1.bf16.msra.mxu0 0
    %353 = vmatprep.mubr.bf16.mxu0 0
    %354 = vmatmul.mubr.bf16.gmra.mrb[0].mxu0 %v70
    %v355 = vpop.f32.mrb[0].mxu0
    %v356 = vadd.f32 %v320, %v355
    %v357 = vpop.f32.mrb[0].mxu0
    %v358 = vpop.f32.mrb[0].mxu0
    %v359 = vadd.f32 %v320, %v358
    %v360 = vpop.f32.mrb[0].mxu0
    %361 = vmatprep.mubr.bf16.mxu0 0
    %362 = vmatmul.mubr.bf16.gmra.mrb[0].mxu0 %v73
    %v363 = vpop.f32.mrb[0].mxu0
    %v364 = vadd.f32 %v320, %v363
    %v365 = vpop.f32.mrb[0].mxu0
    %v366 = vpop.f32.mrb[0].mxu0
    %v367 = vadd.f32 %v320, %v366
    %v368 = vpop.f32.mrb[0].mxu0
    %369 = vdwg.mxu0
    %v370 = vmax.f32 %v356, 0.0
    %v371 = vmax.f32 %v359, 0.0
    %v372 = vmax.f32 %v364, 0.0
    %v373 = vmax.f32 %v367, 0.0
    %v374 = vpack.c.bf16 %v371, %v370
    %v375 = vpack.c.bf16 %v373, %v372
    %v376 = vld [vmem:[%s4] sm:$0xf]
    %v377 = vld [vmem:[%s4 + $0x4] sm:$0xf]
    %v378 = vld [vmem:[%s4 + $0x8] sm:$0xf]
    %v379 = vld [vmem:[%s4 + $0xc] sm:$0xf]
    %v380 = vld [vmem:[%s4 + $0x10] sm:$0xf]
    %v381 = vld [vmem:[%s4 + $0x14] sm:$0xf]
    %v382 = vld [vmem:[%s4 + $0x18] sm:$0xf]
    %v383 = vld [vmem:[%s4 + $0x1c] sm:$0xf]
    %v384 = vld [vmem:[%s4 + $0x20] sm:$0xf]
    %v385 = vld [vmem:[%s4 + $0x24] sm:$0xf]
    %v386 = vld [vmem:[%s4 + $0x28] sm:$0xf]
    %v387 = vld [vmem:[%s4 + $0x2c] sm:$0xf]
    %v388 = vld [vmem:[%s4 + $0x30] sm:$0xf]
    %v389 = vld [vmem:[%s4 + $0x34] sm:$0xf]
    %v390 = vld [vmem:[%s4 + $0x38] sm:$0xf]
    %v391 = vld [vmem:[%s4 + $0x3c] sm:$0xf]
    %v408 = vunpack.c.l.b16 %v376
    %v409 = vunpack.c.l.b16 %v377
    %v410 = vunpack.c.l.b16 %v378
    %v411 = vunpack.c.l.b16 %v379
    %v412 = vunpack.c.l.b16 %v380
    %v413 = vunpack.c.l.b16 %v381
    %v414 = vunpack.c.l.b16 %v382
    %v415 = vunpack.c.l.b16 %v383
    %v416 = vunpack.c.l.b16 %v384
    %v417 = vunpack.c.l.b16 %v385
    %v418 = vunpack.c.l.b16 %v386
    %v419 = vunpack.c.l.b16 %v387
    %v420 = vunpack.c.l.b16 %v388
    %v421 = vunpack.c.l.b16 %v389
    %v422 = vunpack.c.l.b16 %v390
    %v423 = vunpack.c.l.b16 %v391
    %v424 = vpack.c.b16 %v409, %v408
    %v425 = vpack.c.b16 %v411, %v410
    %v426 = vpack.c.b16 %v413, %v412
    %v427 = vpack.c.b16 %v415, %v414
    %v428 = vpack.c.b16 %v417, %v416
    %v429 = vpack.c.b16 %v419, %v418
    %v430 = vpack.c.b16 %v421, %v420
    %v431 = vpack.c.b16 %v423, %v422
    %440 = vmatprep.subr.bf16.mxu0 0
    %441 = vmatpush1.bf16.msra.mxu0 %v424
    %442 = vmatprep.subr.bf16.mxu0 0
    %443 = vmatpush1.bf16.msra.mxu0 %v425
    %444 = vmatprep.subr.bf16.mxu0 0
    %445 = vmatpush1.bf16.msra.mxu0 %v426
    %446 = vmatprep.subr.bf16.mxu0 0
    %447 = vmatpush1.bf16.msra.mxu0 %v427
    %448 = vmatprep.subr.bf16.mxu0 0
    %449 = vmatpush1.bf16.msra.mxu0 %v428
    %450 = vmatprep.subr.bf16.mxu0 0
    %451 = vmatpush1.bf16.msra.mxu0 %v429
    %452 = vmatprep.subr.bf16.mxu0 0
    %453 = vmatpush1.bf16.msra.mxu0 %v430
    %454 = vmatprep.subr.bf16.mxu0 0
    %455 = vmatpush1.bf16.msra.mxu0 %v431
    %456 = vmatprep.subr.bf16.mxu0 0
    %457 = vmatpush1.bf16.msra.mxu0 0
    %458 = vmatprep.subr.bf16.mxu0 0
    %459 = vmatpush1.bf16.msra.mxu0 0
    %460 = vmatprep.subr.bf16.mxu0 0
    %461 = vmatpush1.bf16.msra.mxu0 0
    %462 = vmatprep.subr.bf16.mxu0 0
    %463 = vmatpush1.bf16.msra.mxu0 0
    %464 = vmatprep.subr.bf16.mxu0 0
    %465 = vmatpush1.bf16.msra.mxu0 0
    %466 = vmatprep.subr.bf16.mxu0 0
    %467 = vmatpush1.bf16.msra.mxu0 0
    %468 = vmatprep.subr.bf16.mxu0 0
    %469 = vmatpush1.bf16.msra.mxu0 0
    %470 = vmatprep.subr.bf16.mxu0 0
    %471 = vmatpush1.bf16.msra.mxu0 0
    %472 = vmatprep.mubr.bf16.mxu0 0
    %473 = vmatmul.mubr.bf16.gmra.mrb[0].mxu0 %v374
    %v474 = vpop.f32.mrb[0].mxu0
    %v475 = vadd.f32 0.0, %v474
    %v476 = vpop.f32.mrb[0].mxu0
    %v477 = vpop.f32.mrb[0].mxu0
    %v478 = vadd.f32 0.0, %v477
    %v479 = vpop.f32.mrb[0].mxu0
    %480 = vmatprep.mubr.bf16.mxu0 0
    %481 = vmatmul.mubr.bf16.gmra.mrb[0].mxu0 %v375
    %v482 = vpop.f32.mrb[0].mxu0
    %v483 = vadd.f32 0.0, %v482
    %v484 = vpop.f32.mrb[0].mxu0
    %v485 = vpop.f32.mrb[0].mxu0
    %v486 = vadd.f32 0.0, %v485
    %v487 = vpop.f32.mrb[0].mxu0
    %488 = vdwg.mxu0
    %v489 = vpack.c.bf16 %v478, %v475
    %v490 = vpack.c.bf16 %v486, %v483
    %v491 = vld [vmem:[%s5 + $0x2] sm:$0x1]
    %v492 = vlaneseq
    %v493 = vshrl.u32 %v492, 7
    %v494 = vsub.s32 0, %v493
    %v495 = vrot.slane %v491, %v494
    %496 = vmatprep.subr.bf16.mxu0 0
    %497 = vmatpush1.bf16.msra.mxu0 %v489
    %498 = vmatprep.subr.bf16.mxu0 0
    %499 = vmatpush1.bf16.msra.mxu0 %v490
    %500 = vmatprep.subr.bf16.mxu0 0
    %501 = vmatpush1.bf16.msra.mxu0 0
    %502 = vmatprep.subr.bf16.mxu0 0
    %503 = vmatpush1.bf16.msra.mxu0 0
    %504 = vmatprep.subr.bf16.mxu0 0
    %505 = vmatpush1.bf16.msra.mxu0 0
    %506 = vmatprep.subr.bf16.mxu0 0
    %507 = vmatpush1.bf16.msra.mxu0 0
    %508 = vmatprep.subr.bf16.mxu0 0
    %509 = vmatpush1.bf16.msra.mxu0 0
    %510 = vmatprep.subr.bf16.mxu0 0
    %511 = vmatpush1.bf16.msra.mxu0 0
    %512 = vmatprep.subr.bf16.mxu0 0
    %513 = vmatpush1.bf16.msra.mxu0 0
    %514 = vmatprep.subr.bf16.mxu0 0
    %515 = vmatpush1.bf16.msra.mxu0 0
    %516 = vmatprep.subr.bf16.mxu0 0
    %517 = vmatpush1.bf16.msra.mxu0 0
    %518 = vmatprep.subr.bf16.mxu0 0
    %519 = vmatpush1.bf16.msra.mxu0 0
    %520 = vmatprep.subr.bf16.mxu0 0
    %521 = vmatpush1.bf16.msra.mxu0 0
    %522 = vmatprep.subr.bf16.mxu0 0
    %523 = vmatpush1.bf16.msra.mxu0 0
    %524 = vmatprep.subr.bf16.mxu0 0
    %525 = vmatpush1.bf16.msra.mxu0 0
    %526 = vmatprep.subr.bf16.mxu0 0
    %527 = vmatpush1.bf16.msra.mxu0 0
    %528 = vmatprep.mubr.bf16.mxu0 0
    %529 = vmatmul.mubr.bf16.gmra.mrb[0].mxu0 %v70
    %v530 = vpop.f32.mrb[0].mxu0
    %v531 = vadd.f32 %v495, %v530
    %v532 = vpop.f32.mrb[0].mxu0
    %v533 = vpop.f32.mrb[0].mxu0
    %v534 = vadd.f32 %v495, %v533
    %v535 = vpop.f32.mrb[0].mxu0
    %536 = vmatprep.mubr.bf16.mxu0 0
    %537 = vmatmul.mubr.bf16.gmra.mrb[0].mxu0 %v73
    %v538 = vpop.f32.mrb[0].mxu0
    %v539 = vadd.f32 %v495, %v538
    %v540 = vpop.f32.mrb[0].mxu0
    %v541 = vpop.f32.mrb[0].mxu0
    %v542 = vadd.f32 %v495, %v541
    %v543 = vpop.f32.mrb[0].mxu0
    %544 = vdwg.mxu0
    %545 = vst [vmem:[%s6] sm:$0xff] %v531
    %546 = vst [vmem:[%s6 + $0x8] sm:$0xff] %v534
    %547 = vst [vmem:[%s6 + $0x10] sm:$0xff] %v539
    %548 = vst [vmem:[%s6 + $0x18] sm:$0xff] %v542
    // Predicated region
    $region30: #{_lambda_.1} parent=1 // pred_check
      _
    $region31: #{_lambda_.1} parent=1 // pred_check_branch
      %550 = sbr.rel (0) target = $region33
    $region32: #{_lambda_.1} parent=1 // pred_region
      _
    $region33: #{_lambda_.1} parent=1 // pred_fallthru
      _
    // Predicated region
    $region34: #{_lambda_.1} parent=1 // pred_check
      _
    $region35: #{_lambda_.1} parent=1 // pred_check_branch
      %552 = sbr.rel (0) target = $region37
    $region36: #{_lambda_.1} parent=1 // pred_region
      _
    $region37: #{_lambda_.1} parent=1 // pred_fallthru
      _
    %553 = vsyncpa [#allocation3], 1

</llo_original>
